<compile_context>
chip_gen: v5e
topology: v5e:2x2
jax: 0.10.0
libtpu: 0.0.40
codegen_flags: <defaults>
</compile_context>

<pallas_src>
import functools

import jax
import jax.numpy as jnp
from jax.experimental import pallas as pl
from jax.experimental.pallas import tpu as pltpu

_LANE = 128          # lane width: feature / hidden / class dims padded to this
_SUBL_BF16 = 16      # bf16 packs 16 sublanes per vreg -> row tiles 16-aligned
_NEG_BIG = -1e30     # padded final-layer bias -> exp() underflows to exactly 0
_TILE_N_CAP = 512    # sweepable row-tile cap (try 256 on v5e, 1024 on v6e/v7x)


def _round_up(x, m):
    return (x + m - 1) // m * m


def _make_mlp_kernel(num_layers, out_log):
    """Fused MLP: ((X@W0+b0).relu ...)@W_last+b_last -> softmax / log-softmax."""

    def kernel(x_ref, *refs):
        # refs = (w0, b0, w1, b1, ..., w_{L-1}, b_{L-1}, o_ref)
        o_ref = refs[-1]
        s = x_ref[...]                                    # bf16 (tile_n, D_pad)
        for i in range(num_layers):
            w = refs[2 * i][...]                          # bf16 (K_pad, C_pad)
            b = refs[2 * i + 1][...]                      # f32  (1, C_pad)
            y = jnp.dot(s, w, preferred_element_type=jnp.float32) + b
            if i < num_layers - 1:
                # hidden layer: ReLU in f32, cast back to bf16 for next MXU pass
                s = jnp.maximum(y, 0.0).astype(jnp.bfloat16)
            else:
                # final layer: numerically-stable (log-)softmax over classes
                y = y - jnp.max(y, axis=1, keepdims=True)
                e = jnp.exp(y)                            # f32 (safe on v5e EUP)
                denom = jnp.sum(e, axis=1, keepdims=True)
                if out_log:
                    # exact log-softmax (logsumexp) for the fused loss path
                    o_ref[...] = (y - jnp.log(denom)).astype(o_ref.dtype)
                else:
                    inv = pl.reciprocal(denom, approx=True)   # EUP slot
                    o_ref[...] = (e * inv).astype(o_ref.dtype)

    return kernel


@functools.partial(jax.jit, static_argnames=("num_classes", "out_log"))
def _ptdeep_forward(params, x, *, num_classes, out_log=False):
    """Pure fused forward: params = tuple of (W bf16 padded, b f32 padded)."""
    n, d = x.shape
    num_layers = len(params)
    d_pad = params[0][0].shape[0]
    c_pad = params[-1][0].shape[1]

    # Feature-dim padding / bf16 cast only.  NO batch padding: the ragged last
    # row block is handled by Pallas and its junk rows never reach the output.
    x_bf = x.astype(jnp.bfloat16)
    if d != d_pad:
        x_bf = jnp.pad(x_bf, ((0, 0), (0, d_pad - d)))

    # Row tile: 16-aligned; aim for >= 2 grid steps (keeps both v7x TCs busy),
    # capped so f32 intermediates stay comfortably in vregs/VMEM.
    if n <= _SUBL_BF16:
        tile_n = _SUBL_BF16
    else:
        tile_n = min(_TILE_N_CAP, _round_up(pl.cdiv(n, 2), _SUBL_BF16))
    grid = (pl.cdiv(n, tile_n),)

    flat_params = []
    in_specs = [pl.BlockSpec((tile_n, d_pad), lambda i: (i, 0))]
    for w_p, b_p in params:
        flat_params.append(w_p)
        flat_params.append(b_p)
        # Resident blocks (constant index_map): single-buffer to halve VMEM use.
        in_specs.append(pl.BlockSpec(w_p.shape, lambda i: (0, 0),
                                     pipeline_mode=pl.Buffered(1)))
        in_specs.append(pl.BlockSpec(b_p.shape, lambda i: (0, 0),
                                     pipeline_mode=pl.Buffered(1)))

    # Explicit VMEM budget: resident params + double-buffered I/O tiles + slack.
    param_bytes = sum(w.size * w.dtype.itemsize + b.size * b.dtype.itemsize
                      for w, b in params)
    io_bytes = 2 * tile_n * d_pad * 2 + 2 * tile_n * c_pad * 4
    widest = max([d_pad] + [w.shape[1] for w, _ in params])
    slack = 6 * tile_n * widest * 4 + (4 << 20)
    vmem_limit = int(min(96 << 20, max(32 << 20, param_bytes + io_bytes + slack)))
    # TODO(synk): add a weight-streaming fallback (extra 'arbitrary' grid axis
    # over the largest layer's tiles) when param_bytes > ~40 MiB — needed for
    # v7x (64 MiB VMEM per TensorCore); irrelevant at these toy widths.

    out_padded = pl.pallas_call(
        _make_mlp_kernel(num_layers, out_log),
        out_shape=jax.ShapeDtypeStruct((n, c_pad), jnp.float32),
        grid=grid,
        in_specs=in_specs,
        out_specs=pl.BlockSpec((tile_n, c_pad), lambda i: (i, 0)),
        compiler_params=pltpu.CompilerParams(
            dimension_semantics=("parallel",),
            vmem_limit_bytes=vmem_limit),
    )(x_bf, *flat_params)

    return out_padded[:, :num_classes]


class PTDeepPallas:
    """JAX/Pallas port of PTDeep (ReLU hidden activations, softmax output)."""

    def __init__(self, konfiguracijska_lista, key):
        self.cfg = list(konfiguracijska_lista)
        self.num_layers = len(self.cfg) - 1

        # torch.randn-equivalent init (standard normal), kept in f32.
        weights, biases = [], []
        for i in range(self.num_layers):
            key, kw, kb = jax.random.split(key, 3)
            weights.append(
                jax.random.normal(kw, (self.cfg[i], self.cfg[i + 1]), jnp.float32))
            biases.append(
                jax.random.normal(kb, (self.cfg[i + 1],), jnp.float32))
        self.weights = weights
        self.biases = biases

        # Lane-dense, bf16 parameter copies consumed by the fused kernel.
        # NOTE: padded weight columns must stay exactly zero for the -1e30
        # padded-bias trick to remain sound (re-pad if loading checkpoints).
        padded = []
        for i, (w, b) in enumerate(zip(weights, biases)):
            k_in = _round_up(w.shape[0], _LANE)
            k_out = _round_up(w.shape[1], _LANE)
            w_p = jnp.zeros((k_in, k_out), jnp.bfloat16)
            w_p = w_p.at[:w.shape[0], :w.shape[1]].set(w.astype(jnp.bfloat16))
            fill = _NEG_BIG if i == self.num_layers - 1 else 0.0
            b_p = jnp.full((1, k_out), fill, jnp.float32)
            b_p = b_p.at[0, :b.shape[0]].set(b)
            padded.append((w_p, b_p))
        self.padded_params = tuple(padded)

    def forward(self, x):
        return _ptdeep_forward(self.padded_params, x, num_classes=self.cfg[-1])

    def get_loss(self, x, yoh):
        # Fused loss: the kernel emits exact log-softmax (logsumexp reuse), so
        # there is no probs HBM round-trip.  Matches the PyTorch
        # -mean(sum(log(softmax + 1e-15) * Yoh)) up to the (benign) 1e-15 term.
        logp = _ptdeep_forward(self.padded_params, x,
                               num_classes=self.cfg[-1], out_log=True)
        return -jnp.mean(jnp.sum(logp * yoh, axis=1))


def _reference_forward(weights, biases, x):
    """Plain-JAX reference with the same bf16-input / f32-accumulate arithmetic."""
    s = x.astype(jnp.bfloat16)
    for w, b in zip(weights[:-1], biases[:-1]):
        y = jnp.dot(s, w.astype(jnp.bfloat16),
                    preferred_element_type=jnp.float32) + b
        s = jnp.maximum(y, 0.0).astype(jnp.bfloat16)
    logits = jnp.dot(s, weights[-1].astype(jnp.bfloat16),
                     preferred_element_type=jnp.float32) + biases[-1]
    return jax.nn.softmax(logits, axis=1), jax.nn.log_softmax(logits, axis=1)


if __name__ == "__main__":
    key = jax.random.PRNGKey(0)
    key, kx, kp = jax.random.split(key, 3)

    # config [D, H1, H2, C] = [16, 32, 32, 10]; N = 40 exercises >=2 grid steps
    # (v7x megacore path) plus a ragged last row block.
    cfg = [16, 32, 32, 10]
    N = 40
    x = jax.random.normal(kx, (N, cfg[0]), jnp.float32)

    model = PTDeepPallas(cfg, kp)
    out = jax.block_until_ready(model.forward(x))

    ref_probs, ref_logp = _reference_forward(model.weights, model.biases, x)
    assert out.shape == (N, cfg[-1])
    assert jnp.allclose(out, ref_probs, atol=5e-3, rtol=5e-3), \
        float(jnp.max(jnp.abs(out - ref_probs)))
    assert jnp.allclose(jnp.sum(out, axis=1), 1.0, atol=5e-3)

    # fused loss path (log-softmax output) vs. reference
    yoh = jax.nn.one_hot(jnp.arange(N) % cfg[-1], cfg[-1], dtype=jnp.float32)
    loss = jax.block_until_ready(model.get_loss(x, yoh))
    ref_loss = -jnp.mean(jnp.sum(ref_logp * yoh, axis=1))
    assert bool(jnp.isfinite(loss))
    assert jnp.allclose(loss, ref_loss, atol=5e-2, rtol=5e-2), \
        (float(loss), float(ref_loss))

    print("KERNEL_OK")
</pallas_src>

<mosaic_0001>
module attributes {stable_mosaic.version = 11 : i64} {
  func.func @kernel(%arg0: i32, %arg1: memref<32x128xbf16, #tpu.memory_space<vmem>>, %arg2: memref<128x128xbf16, #tpu.memory_space<vmem>>, %arg3: memref<1x128xf32, #tpu.memory_space<vmem>>, %arg4: memref<128x128xbf16, #tpu.memory_space<vmem>>, %arg5: memref<1x128xf32, #tpu.memory_space<vmem>>, %arg6: memref<128x128xbf16, #tpu.memory_space<vmem>>, %arg7: memref<1x128xf32, #tpu.memory_space<vmem>>, %arg8: memref<32x128xf32, #tpu.memory_space<vmem>>) attributes {dimension_semantics = [#tpu.dimension_semantics<parallel>], iteration_bounds = array<i64: 2>, scalar_prefetch = 0 : i64, scratch_operands = 0 : i64, tpu.core_type = #tpu.core_type<tc>, window_params = [{transform_indices = @transform_0, window_bounds = array<i64: 32, 128>}, {pipeline_mode = #tpu.pipeline_mode<synchronous>, transform_indices = @transform_1, window_bounds = array<i64: 128, 128>}, {pipeline_mode = #tpu.pipeline_mode<synchronous>, transform_indices = @transform_2, window_bounds = array<i64: 1, 128>}, {pipeline_mode = #tpu.pipeline_mode<synchronous>, transform_indices = @transform_3, window_bounds = array<i64: 128, 128>}, {pipeline_mode = #tpu.pipeline_mode<synchronous>, transform_indices = @transform_4, window_bounds = array<i64: 1, 128>}, {pipeline_mode = #tpu.pipeline_mode<synchronous>, transform_indices = @transform_5, window_bounds = array<i64: 128, 128>}, {pipeline_mode = #tpu.pipeline_mode<synchronous>, transform_indices = @transform_6, window_bounds = array<i64: 1, 128>}, {transform_indices = @transform_7, window_bounds = array<i64: 32, 128>}]} {
    %c0 = arith.constant 0 : index
    %c0_0 = arith.constant 0 : index
    %0 = vector.load %arg1[%c0, %c0_0] : memref<32x128xbf16, #tpu.memory_space<vmem>>, vector<32x128xbf16>
    %c0_1 = arith.constant 0 : index
    %c0_2 = arith.constant 0 : index
    %1 = vector.load %arg2[%c0_1, %c0_2] : memref<128x128xbf16, #tpu.memory_space<vmem>>, vector<128x128xbf16>
    %c0_3 = arith.constant 0 : index
    %c0_4 = arith.constant 0 : index
    %2 = vector.load %arg3[%c0_3, %c0_4] : memref<1x128xf32, #tpu.memory_space<vmem>>, vector<1x128xf32>
    %cst = arith.constant dense<0.000000e+00> : vector<32x128xf32>
    %3 = tpu.matmul %0, %1, %cst {dimension_numbers = #tpu.dot_dimension_numbers<[1], [0], [0], [1], [0, 0, 1, 1], [], []>} : vector<32x128xbf16>, vector<128x128xbf16>, vector<32x128xf32> -> vector<32x128xf32>
    %4 = vector.broadcast %2 : vector<1x128xf32> to vector<32x128xf32>
    %5 = arith.addf %3, %4 : vector<32x128xf32>
    %cst_5 = arith.constant 0.000000e+00 : f32
    %6 = vector.broadcast %cst_5 : f32 to vector<32x128xf32>
    %7 = arith.maximumf %5, %6 : vector<32x128xf32>
    %8 = arith.truncf %7 : vector<32x128xf32> to vector<32x128xbf16>
    %c0_6 = arith.constant 0 : index
    %c0_7 = arith.constant 0 : index
    %9 = vector.load %arg4[%c0_6, %c0_7] : memref<128x128xbf16, #tpu.memory_space<vmem>>, vector<128x128xbf16>
    %c0_8 = arith.constant 0 : index
    %c0_9 = arith.constant 0 : index
    %10 = vector.load %arg5[%c0_8, %c0_9] : memref<1x128xf32, #tpu.memory_space<vmem>>, vector<1x128xf32>
    %cst_10 = arith.constant dense<0.000000e+00> : vector<32x128xf32>
    %11 = tpu.matmul %8, %9, %cst_10 {dimension_numbers = #tpu.dot_dimension_numbers<[1], [0], [0], [1], [0, 0, 1, 1], [], []>} : vector<32x128xbf16>, vector<128x128xbf16>, vector<32x128xf32> -> vector<32x128xf32>
    %12 = vector.broadcast %10 : vector<1x128xf32> to vector<32x128xf32>
    %13 = arith.addf %11, %12 : vector<32x128xf32>
    %cst_11 = arith.constant 0.000000e+00 : f32
    %14 = vector.broadcast %cst_11 : f32 to vector<32x128xf32>
    %15 = arith.maximumf %13, %14 : vector<32x128xf32>
    %16 = arith.truncf %15 : vector<32x128xf32> to vector<32x128xbf16>
    %c0_12 = arith.constant 0 : index
    %c0_13 = arith.constant 0 : index
    %17 = vector.load %arg6[%c0_12, %c0_13] : memref<128x128xbf16, #tpu.memory_space<vmem>>, vector<128x128xbf16>
    %c0_14 = arith.constant 0 : index
    %c0_15 = arith.constant 0 : index
    %18 = vector.load %arg7[%c0_14, %c0_15] : memref<1x128xf32, #tpu.memory_space<vmem>>, vector<1x128xf32>
    %cst_16 = arith.constant dense<0.000000e+00> : vector<32x128xf32>
    %19 = tpu.matmul %16, %17, %cst_16 {dimension_numbers = #tpu.dot_dimension_numbers<[1], [0], [0], [1], [0, 0, 1, 1], [], []>} : vector<32x128xbf16>, vector<128x128xbf16>, vector<32x128xf32> -> vector<32x128xf32>
    %20 = vector.broadcast %18 : vector<1x128xf32> to vector<32x128xf32>
    %21 = arith.addf %19, %20 : vector<32x128xf32>
    %cst_17 = arith.constant dense<0xFF800000> : vector<32xf32>
    %22 = vector.multi_reduction <maximumf>, %21, %cst_17 [1] : vector<32x128xf32> to vector<32xf32>
    %23 = vector.shape_cast %22 : vector<32xf32> to vector<32x1xf32>
    %24 = vector.broadcast %23 : vector<32x1xf32> to vector<32x128xf32>
    %25 = arith.subf %21, %24 : vector<32x128xf32>
    %26 = math.exp %25 : vector<32x128xf32>
    %cst_18 = arith.constant dense<0.000000e+00> : vector<32xf32>
    %27 = vector.multi_reduction <add>, %26, %cst_18 [1] : vector<32x128xf32> to vector<32xf32>
    %28 = vector.shape_cast %27 : vector<32xf32> to vector<32x1xf32>
    %29 = tpu.reciprocal %28 {approx = true} : vector<32x1xf32> -> vector<32x1xf32>
    %30 = vector.broadcast %29 : vector<32x1xf32> to vector<32x128xf32>
    %31 = arith.mulf %26, %30 : vector<32x128xf32>
    %c0_19 = arith.constant 0 : index
    %c0_20 = arith.constant 0 : index
    %32 = vector.load %arg8[%c0_19, %c0_20] : memref<32x128xf32, #tpu.memory_space<vmem>>, vector<32x128xf32>
    tpu.vector_store %arg8[%c0_19, %c0_20], %31 {strides = array<i32>} : memref<32x128xf32, #tpu.memory_space<vmem>>, vector<32x128xf32>,
    return
  }
  func.func @transform_0(%arg0: i32) -> (i32, i32) {
    %c0_i32 = arith.constant 0 : i32
    %c0_i32_0 = arith.constant 0 : i32
    return %arg0, %c0_i32 : i32, i32
  }
  func.func @transform_1(%arg0: i32) -> (i32, i32) {
    %c0_i32 = arith.constant 0 : i32
    %c0_i32_0 = arith.constant 0 : i32
    %c0_i32_1 = arith.constant 0 : i32
    return %c0_i32, %c0_i32_0 : i32, i32
  }
  func.func @transform_2(%arg0: i32) -> (i32, i32) {
    %c0_i32 = arith.constant 0 : i32
    %c0_i32_0 = arith.constant 0 : i32
    %c0_i32_1 = arith.constant 0 : i32
    return %c0_i32, %c0_i32_0 : i32, i32
  }
  func.func @transform_3(%arg0: i32) -> (i32, i32) {
    %c0_i32 = arith.constant 0 : i32
    %c0_i32_0 = arith.constant 0 : i32
    %c0_i32_1 = arith.constant 0 : i32
    return %c0_i32, %c0_i32_0 : i32, i32
  }
  func.func @transform_4(%arg0: i32) -> (i32, i32) {
    %c0_i32 = arith.constant 0 : i32
    %c0_i32_0 = arith.constant 0 : i32
    %c0_i32_1 = arith.constant 0 : i32
    return %c0_i32, %c0_i32_0 : i32, i32
  }
  func.func @transform_5(%arg0: i32) -> (i32, i32) {
    %c0_i32 = arith.constant 0 : i32
    %c0_i32_0 = arith.constant 0 : i32
    %c0_i32_1 = arith.constant 0 : i32
    return %c0_i32, %c0_i32_0 : i32, i32
  }
  func.func @transform_6(%arg0: i32) -> (i32, i32) {
    %c0_i32 = arith.constant 0 : i32
    %c0_i32_0 = arith.constant 0 : i32
    %c0_i32_1 = arith.constant 0 : i32
    return %c0_i32, %c0_i32_0 : i32, i32
  }
  func.func @transform_7(%arg0: i32) -> (i32, i32) {
    %c0_i32 = arith.constant 0 : i32
    %c0_i32_0 = arith.constant 0 : i32
    return %arg0, %c0_i32 : i32, i32
  }
}

</mosaic_0001>

<llo_original>
// kernel: _ptdeep_forward.1
$region0: #{_ptdeep_forward.1}
  #allocation0 [shape = 'u32[]', space=smem, size = 0x4, offset = 0x4, fixed_abs, tag = 'smem constant byte address 0x4 - core index']
  #allocation1 [shape = 'u32[72,128]{1,0:T(1,128)}', space=vmem, size = 0x9000, scoped, tag = 'internal scratch']
  %s0 = inlined_call_operand.vmem [shape: bf16[40,128], index: 0, kind: input, shape index: {}]
  %s1 = inlined_call_operand.vmem [shape: bf16[128,128], index: 1, kind: input, shape index: {}]
  %s2 = inlined_call_operand.vmem [shape: f32[1,128], index: 2, kind: input, shape index: {}]
  %s3 = inlined_call_operand.hbm [shape: bf16[128,128], index: 3, kind: input, shape index: {}]
  %s4 = inlined_call_operand.vmem [shape: f32[1,128], index: 4, kind: input, shape index: {}]
  %s5 = inlined_call_operand.hbm [shape: bf16[128,128], index: 5, kind: input, shape index: {}]
  %s6 = inlined_call_operand.vmem [shape: f32[1,128], index: 6, kind: input, shape index: {}]
  %s7 = inlined_call_operand.vmem [shape: f32[40,128], index: 7, kind: output, shape index: {}]
  %s8 = sld [smem:[#allocation0]]
  $region117: #{_ptdeep_forward.1} parent=0
    _
  %s10 = ssub.s32 1, %s8
  %s11 = scalar_select 0, %s10, %s8
  $region1: #{_ptdeep_forward.1} parent=0
    #allocation2 [shape = 'u8[32768]{0}', space=vmem, size = 0x8000, scoped, tag = 'input window, operand 3, single buffered']
    #allocation3 [shape = 's32[2]{0}', space=sflag, size = 0x8, scoped, tag = 'scoped memory for _ptdeep_forward.1']
    #allocation4 [shape = 'u8[32768]{0}', space=vmem, size = 0x8000, scoped, tag = 'input window, operand 5, single buffered']
    #allocation5 [shape = 's32[1]{0}', space=sflag, size = 0x4, scoped, tag = 'scoped memory for _ptdeep_forward.1']
    #allocation6 [shape = 'u8[32768]{0}', space=vmem, size = 0x8000, scoped, tag = 'output window, operand 0']
    %12 = vsyncpa [#allocation3], 0
    %13 = vsyncpa [#allocation5], 0
    loop: start=0, step=1, limit=4
    $region2: #{_ptdeep_forward.1} parent=1 // loop_pre_header
      _
    $region3: #{_ptdeep_forward.1} parent=1 // loop_header
      %s15 = sphi 0, %s19
      %p16 = scmp.ge.s32.totalorder %s15, 4
      %s25 = sphi 0, %s27
      %s28 = sphi 0, %s25
      %s29 = sphi 0, %s28
      %s45 = sphi 0, %s29
      %s49 = sphi 0, %s49
      %s51 = sphi 0, %s49
      %s52 = sphi 0, %s51
      %s66 = sphi 0, %s52
      %s70 = sphi 0, %s70
      %s72 = sphi 0, %s70
      %s73 = sphi 0, %s72
      %s87 = sphi 0, %s73
      %s91 = sphi 0, %s91
      %s93 = sphi 0, %s91
      %s94 = sphi 0, %s93
      %s108 = sphi 0, %s94
      %s112 = sphi 0, %s112
      %s114 = sphi 0, %s112
      %s115 = sphi 0, %s114
      %s129 = sphi 0, %s115
      %s133 = sphi 0, %s133
      %s135 = sphi 0, %s133
      %s136 = sphi 0, %s135
      %s150 = sphi 0, %s136
      %s154 = sphi 0, %s154
      %s156 = sphi 0, %s154
      %s157 = sphi 0, %s156
      %s171 = sphi 0, %s157
      %s177 = sphi 0, %s179
      %s180 = sphi 0, %s177
      %s181 = sphi 0, %s180
      %s197 = sphi 0, %s181
    $region4: #{_ptdeep_forward.1} parent=1 // loop_header_branch
      %18 = sbr.rel (%p16) target = $region8
    $region5: #{_ptdeep_forward.1} parent=1 // loop_body
      %s20 = ssub.s32 %s15, 1
      %s21 = ssub.s32 %s15, 2
      %s22 = sadd.s32 %s15, 1
      %s23 = ssub.s32 %s15, %s22
      %p24 = scmp.eq.s32.totalorder %s23, 0
      %s26 = sadd.s32 %s25, 1
      %s27 = scalar_select %p24, %s25, %s26
      %p30 = pneg %p24
      %p31 = scmp.eq.s32.totalorder %s15, 1
      %p32 = por %p30, %p31
      %p33 = scmp.ne.s32.totalorder %s25, %s28
      %p34 = scmp.eq.s32.totalorder %s15, 0
      %p35 = por %p33, %p34
      %p36 = scmp.ne.s32.totalorder %s25, %s28
      %p37 = scmp.eq.s32.totalorder %s20, 1
      %p38 = por %p36, %p37
      %p39 = scmp.ne.s32.totalorder %s28, %s29
      %p40 = scmp.eq.s32.totalorder %s20, 0
      %p41 = por %p39, %p40
      %p42 = scmp.ne.s32.totalorder %s28, %s29
      %p43 = scmp.eq.s32.totalorder %s21, 1
      %p44 = por %p42, %p43
      %p46 = scmp.ne.s32.totalorder %s29, %s45
      %p47 = scmp.eq.s32.totalorder %s21, 0
      %p48 = por %p46, %p47
      %s50 = sadd.s32 %s49, 1
      %p53 = scmp.eq.s32.totalorder %s15, 1
      %p54 = scmp.ne.s32.totalorder %s49, %s51
      %p55 = scmp.eq.s32.totalorder %s15, 0
      %p56 = por %p54, %p55
      %p57 = scmp.ne.s32.totalorder %s49, %s51
      %p58 = scmp.eq.s32.totalorder %s20, 1
      %p59 = por %p57, %p58
      %p60 = scmp.ne.s32.totalorder %s51, %s52
      %p61 = scmp.eq.s32.totalorder %s20, 0
      %p62 = por %p60, %p61
      %p63 = scmp.ne.s32.totalorder %s51, %s52
      %p64 = scmp.eq.s32.totalorder %s21, 1
      %p65 = por %p63, %p64
      %p67 = scmp.ne.s32.totalorder %s52, %s66
      %p68 = scmp.eq.s32.totalorder %s21, 0
      %p69 = por %p67, %p68
      %s71 = sadd.s32 %s70, 1
      %p74 = scmp.eq.s32.totalorder %s15, 1
      %p75 = scmp.ne.s32.totalorder %s70, %s72
      %p76 = scmp.eq.s32.totalorder %s15, 0
      %p77 = por %p75, %p76
      %p78 = scmp.ne.s32.totalorder %s70, %s72
      %p79 = scmp.eq.s32.totalorder %s20, 1
      %p80 = por %p78, %p79
      %p81 = scmp.ne.s32.totalorder %s72, %s73
      %p82 = scmp.eq.s32.totalorder %s20, 0
      %p83 = por %p81, %p82
      %p84 = scmp.ne.s32.totalorder %s72, %s73
      %p85 = scmp.eq.s32.totalorder %s21, 1
      %p86 = por %p84, %p85
      %p88 = scmp.ne.s32.totalorder %s73, %s87
      %p89 = scmp.eq.s32.totalorder %s21, 0
      %p90 = por %p88, %p89
      %s92 = sadd.s32 %s91, 1
      %p95 = scmp.eq.s32.totalorder %s15, 1
      %p96 = scmp.ne.s32.totalorder %s91, %s93
      %p97 = scmp.eq.s32.totalorder %s15, 0
      %p98 = por %p96, %p97
      %p99 = scmp.ne.s32.totalorder %s91, %s93
      %p100 = scmp.eq.s32.totalorder %s20, 1
      %p101 = por %p99, %p100
      %p102 = scmp.ne.s32.totalorder %s93, %s94
      %p103 = scmp.eq.s32.totalorder %s20, 0
      %p104 = por %p102, %p103
      %p105 = scmp.ne.s32.totalorder %s93, %s94
      %p106 = scmp.eq.s32.totalorder %s21, 1
      %p107 = por %p105, %p106
      %p109 = scmp.ne.s32.totalorder %s94, %s108
      %p110 = scmp.eq.s32.totalorder %s21, 0
      %p111 = por %p109, %p110
      %s113 = sadd.s32 %s112, 1
      %p116 = scmp.eq.s32.totalorder %s15, 1
      %p117 = scmp.ne.s32.totalorder %s112, %s114
      %p118 = scmp.eq.s32.totalorder %s15, 0
      %p119 = por %p117, %p118
      %p120 = scmp.ne.s32.totalorder %s112, %s114
      %p121 = scmp.eq.s32.totalorder %s20, 1
      %p122 = por %p120, %p121
      %p123 = scmp.ne.s32.totalorder %s114, %s115
      %p124 = scmp.eq.s32.totalorder %s20, 0
      %p125 = por %p123, %p124
      %p126 = scmp.ne.s32.totalorder %s114, %s115
      %p127 = scmp.eq.s32.totalorder %s21, 1
      %p128 = por %p126, %p127
      %p130 = scmp.ne.s32.totalorder %s115, %s129
      %p131 = scmp.eq.s32.totalorder %s21, 0
      %p132 = por %p130, %p131
      %s134 = sadd.s32 %s133, 1
      %p137 = scmp.eq.s32.totalorder %s15, 1
      %p138 = scmp.ne.s32.totalorder %s133, %s135
      %p139 = scmp.eq.s32.totalorder %s15, 0
      %p140 = por %p138, %p139
      %p141 = scmp.ne.s32.totalorder %s133, %s135
      %p142 = scmp.eq.s32.totalorder %s20, 1
      %p143 = por %p141, %p142
      %p144 = scmp.ne.s32.totalorder %s135, %s136
      %p145 = scmp.eq.s32.totalorder %s20, 0
      %p146 = por %p144, %p145
      %p147 = scmp.ne.s32.totalorder %s135, %s136
      %p148 = scmp.eq.s32.totalorder %s21, 1
      %p149 = por %p147, %p148
      %p151 = scmp.ne.s32.totalorder %s136, %s150
      %p152 = scmp.eq.s32.totalorder %s21, 0
      %p153 = por %p151, %p152
      %s155 = sadd.s32 %s154, 1
      %p158 = scmp.eq.s32.totalorder %s15, 1
      %p159 = scmp.ne.s32.totalorder %s154, %s156
      %p160 = scmp.eq.s32.totalorder %s15, 0
      %p161 = por %p159, %p160
      %p162 = scmp.ne.s32.totalorder %s154, %s156
      %p163 = scmp.eq.s32.totalorder %s20, 1
      %p164 = por %p162, %p163
      %p165 = scmp.ne.s32.totalorder %s156, %s157
      %p166 = scmp.eq.s32.totalorder %s20, 0
      %p167 = por %p165, %p166
      %p168 = scmp.ne.s32.totalorder %s156, %s157
      %p169 = scmp.eq.s32.totalorder %s21, 1
      %p170 = por %p168, %p169
      %p172 = scmp.ne.s32.totalorder %s157, %s171
      %p173 = scmp.eq.s32.totalorder %s21, 0
      %p174 = por %p172, %p173
      %s175 = ssub.s32 %s15, %s22
      %p176 = scmp.eq.s32.totalorder %s175, 0
      %s178 = sadd.s32 %s177, 1
      %s179 = scalar_select %p176, %s177, %s178
      %p182 = pneg %p176
      %p183 = scmp.eq.s32.totalorder %s15, 1
      %p184 = por %p182, %p183
      %p185 = scmp.ne.s32.totalorder %s177, %s180
      %p186 = scmp.eq.s32.totalorder %s15, 0
      %p187 = por %p185, %p186
      %p188 = scmp.ne.s32.totalorder %s177, %s180
      %p189 = scmp.eq.s32.totalorder %s20, 1
      %p190 = por %p188, %p189
      %p191 = scmp.ne.s32.totalorder %s180, %s181
      %p192 = scmp.eq.s32.totalorder %s20, 0
      %p193 = por %p191, %p192
      %p194 = scmp.ne.s32.totalorder %s180, %s181
      %p195 = scmp.eq.s32.totalorder %s21, 1
      %p196 = por %p194, %p195
      %p198 = scmp.ne.s32.totalorder %s181, %s197
      %p199 = scmp.eq.s32.totalorder %s21, 0
      %p200 = por %p198, %p199
      %p201 = scmp.le.s32.totalorder 1, %s15
      %p202 = scmp.lt.s32.totalorder %s15, 3
      %p203 = pnand %p201, %p202
      %p204 = pneg %p203
      // Predicated region
      $region9: #{_ptdeep_forward.1} parent=5 // pred_check
        _
      $region10: #{_ptdeep_forward.1} parent=5 // pred_check_branch
        %206 = sbr.rel (%p203) target = $region12
      $region11: #{_ptdeep_forward.1} parent=5 // pred_region
        %s207 = ssub.s32 %s15, 1
        // Predicated region
        $region13: #{_ptdeep_forward.1} parent=11 // pred_check
          %p208 = pneg %p62
        $region14: #{_ptdeep_forward.1} parent=11 // pred_check_branch
          %210 = sbr.rel (%p208) target = $region16
        $region15: #{_ptdeep_forward.1} parent=11 // pred_region
          _
        $region16: #{_ptdeep_forward.1} parent=11 // pred_fallthru
          _
        // Predicated region
        $region17: #{_ptdeep_forward.1} parent=11 // pred_check
          %p211 = pneg %p83
        $region18: #{_ptdeep_forward.1} parent=11 // pred_check_branch
          %213 = sbr.rel (%p211) target = $region20
        $region19: #{_ptdeep_forward.1} parent=11 // pred_region
          _
        $region20: #{_ptdeep_forward.1} parent=11 // pred_fallthru
          _
        // Predicated region
        $region21: #{_ptdeep_forward.1} parent=11 // pred_check
          %p214 = pneg %p104
        $region22: #{_ptdeep_forward.1} parent=11 // pred_check_branch
          %216 = sbr.rel (%p214) target = $region24
        $region23: #{_ptdeep_forward.1} parent=11 // pred_region
          %218 = vsyncadd [#allocation3], 0
          %s219 = sshll.u32 %s3, 4
          %s220 = int_to_ptr.hbm [resolvable:$true] %s219
          %s221 = sshll.u32 [#allocation2], 4
          %s222 = int_to_ptr.vmem [resolvable:$true] %s221
          %227 = dma.hbm_to_vmem [thread:$0]  %s220, 1024, %s222, [#allocation3], 64, 64, 4
        $region24: #{_ptdeep_forward.1} parent=11 // pred_fallthru
          _
        // Predicated region
        $region25: #{_ptdeep_forward.1} parent=11 // pred_check
          %p228 = pneg %p125
        $region26: #{_ptdeep_forward.1} parent=11 // pred_check_branch
          %230 = sbr.rel (%p228) target = $region28
        $region27: #{_ptdeep_forward.1} parent=11 // pred_region
          _
        $region28: #{_ptdeep_forward.1} parent=11 // pred_fallthru
          _
        // Predicated region
        $region29: #{_ptdeep_forward.1} parent=11 // pred_check
          %p231 = pneg %p146
        $region30: #{_ptdeep_forward.1} parent=11 // pred_check_branch
          %233 = sbr.rel (%p231) target = $region32
        $region31: #{_ptdeep_forward.1} parent=11 // pred_region
          %235 = vsyncadd [#allocation5], 0
          %s236 = sshll.u32 %s5, 4
          %s237 = int_to_ptr.hbm [resolvable:$true] %s236
          %s238 = sshll.u32 [#allocation4], 4
          %s239 = int_to_ptr.vmem [resolvable:$true] %s238
          %244 = dma.hbm_to_vmem [thread:$0]  %s237, 1024, %s239, [#allocation5], 64, 64, 4
        $region32: #{_ptdeep_forward.1} parent=11 // pred_fallthru
          _
        // Predicated region
        $region33: #{_ptdeep_forward.1} parent=11 // pred_check
          %p245 = pneg %p167
        $region34: #{_ptdeep_forward.1} parent=11 // pred_check_branch
          %247 = sbr.rel (%p245) target = $region36
        $region35: #{_ptdeep_forward.1} parent=11 // pred_region
          _
        $region36: #{_ptdeep_forward.1} parent=11 // pred_fallthru
          _
      $region12: #{_ptdeep_forward.1} parent=5 // pred_fallthru
        _
      %p248 = scmp.lt.s32.totalorder %s15, 2
      // Predicated region
      $region37: #{_ptdeep_forward.1} parent=5 // pred_check
        %p249 = pneg %p248
      $region38: #{_ptdeep_forward.1} parent=5 // pred_check_branch
        %251 = sbr.rel (%p249) target = $region40
      $region39: #{_ptdeep_forward.1} parent=5 // pred_region
        // Predicated region
        $region41: #{_ptdeep_forward.1} parent=39 // pred_check
          %p252 = pneg %p35
        $region42: #{_ptdeep_forward.1} parent=39 // pred_check_branch
          %254 = sbr.rel (%p252) target = $region44
        $region43: #{_ptdeep_forward.1} parent=39 // pred_region
          %s255 = smul.u32 4, %s15
          %s256 = ssub.s32 5, %s255
          %p257 = scmp.lt.s32.totalorder %s256, 4
          %s258 = scalar_select %p257, %s256, 4
          %s259 = smul.u32 4, %s258
          %p260 = scmp.lt.s32.totalorder %s255, 4
          %s261 = scalar_select %p260, %s255, 4
          %s262 = smul.addr %s261, 4
          %s263 = scalar_lea.vmem %s0, %s262
          %s264 = smul.u32 4, %s15
          %s265 = ssub.s32 5, %s264
          %p266 = scmp.lt.s32.totalorder %s265, 4
          %s267 = scalar_select %p266, %s265, 4
          %s268 = smul.u32 4, %s267
        $region44: #{_ptdeep_forward.1} parent=39 // pred_fallthru
          _
      $region40: #{_ptdeep_forward.1} parent=5 // pred_fallthru
        _
      %p269 = scmp.le.s32.totalorder 1, %s15
      %p270 = scmp.lt.s32.totalorder %s15, 3
      %p271 = pnand %p269, %p270
      %p272 = pneg %p271
      // Predicated region
      $region45: #{_ptdeep_forward.1} parent=5 // pred_check
        _
      $region46: #{_ptdeep_forward.1} parent=5 // pred_check_branch
        %274 = sbr.rel (%p271) target = $region48
      $region47: #{_ptdeep_forward.1} parent=5 // pred_region
        %s275 = ssub.s32 %s15, 1
        // Predicated region
        $region49: #{_ptdeep_forward.1} parent=47 // pred_check
          %p276 = pneg %p104
        $region50: #{_ptdeep_forward.1} parent=47 // pred_check_branch
          %278 = sbr.rel (%p276) target = $region52
        $region51: #{_ptdeep_forward.1} parent=47 // pred_region
          %280 = dma.done [#allocation3], 1024
        $region52: #{_ptdeep_forward.1} parent=47 // pred_fallthru
          _
        // Predicated region
        $region53: #{_ptdeep_forward.1} parent=47 // pred_check
          %p281 = pneg %p146
        $region54: #{_ptdeep_forward.1} parent=47 // pred_check_branch
          %283 = sbr.rel (%p281) target = $region56
        $region55: #{_ptdeep_forward.1} parent=47 // pred_region
          %285 = dma.done [#allocation5], 1024
        $region56: #{_ptdeep_forward.1} parent=47 // pred_fallthru
          _
        %s286 = smul.u32 4, %s20
        %s287 = ssub.s32 5, %s286
        %p288 = scmp.lt.s32.totalorder %s287, 4
        %s289 = scalar_select %p288, %s287, 4
        %s290 = smul.u32 4, %s289
        %p291 = scmp.lt.s32.totalorder %s286, 4
        %s292 = scalar_select %p291, %s286, 4
        %s293 = smul.addr %s292, 4
        %s294 = scalar_lea.vmem %s0, %s293
        %p295 = pneg %p41
        %p296 = pneg %p38
        %p297 = pneg %p62
        %p298 = pneg %p59
        %p299 = pneg %p83
        %p300 = pneg %p80
        %p301 = pneg %p104
        %p302 = pneg %p101
        %p303 = pneg %p125
        %p304 = pneg %p122
        %p305 = pneg %p146
        %p306 = pneg %p143
        %p307 = pneg %p167
        %p308 = pneg %p164
        %p309 = pneg %p193
        %p310 = pneg %p190
        %s311 = sand.u32 %s180, 1
        %s312 = sand.u32 %s180, 1
        %s313 = smul.addr %s312, 32
        %s314 = scalar_lea.vmem [#allocation6], %s313
        %s315 = smul.u32 4, %s20
        %s316 = ssub.s32 5, %s315
        %p317 = scmp.lt.s32.totalorder %s316, 4
        %s318 = scalar_select %p317, %s316, 4
        %s319 = smul.u32 4, %s318
        %p320 = scmp.lt.s32.totalorder %s315, 4
        %s321 = scalar_select %p320, %s315, 4
        %s322 = smul.addr %s321, 4
        %s323 = scalar_lea.vmem %s0, %s322
        %s324 = smul.u32 4, %s20
        %s325 = ssub.s32 5, %s324
        %p326 = scmp.lt.s32.totalorder %s325, 4
        %s327 = scalar_select %p326, %s325, 4
        %s328 = smul.u32 4, %s327
        %s329 = smul.u32 4, %s20
        %s330 = ssub.s32 5, %s329
        %p331 = scmp.lt.s32.totalorder %s330, 4
        %s332 = scalar_select %p331, %s330, 4
        %s333 = smul.u32 8, %s332
        %v334 = vld [vmem:[%s323] sm:$0xf]
        %v335 = vld [vmem:[%s323 + $0x4] sm:$0xf]
        %v336 = vld [vmem:[%s323 + $0x8] sm:$0xf]
        %v337 = vld [vmem:[%s323 + $0xc] sm:$0xf]
        %v338 = vld [vmem:[%s1] sm:$0xf]
        %v339 = vld [vmem:[%s1 + $0x4] sm:$0xf]
        %v340 = vld [vmem:[%s1 + $0x8] sm:$0xf]
        %v341 = vld [vmem:[%s1 + $0xc] sm:$0xf]
        %v342 = vld [vmem:[%s1 + $0x10] sm:$0xf]
        %v343 = vld [vmem:[%s1 + $0x14] sm:$0xf]
        %v344 = vld [vmem:[%s1 + $0x18] sm:$0xf]
        %v345 = vld [vmem:[%s1 + $0x1c] sm:$0xf]
        %v346 = vld [vmem:[%s1 + $0x20] sm:$0xf]
        %v347 = vld [vmem:[%s1 + $0x24] sm:$0xf]
        %v348 = vld [vmem:[%s1 + $0x28] sm:$0xf]
        %v349 = vld [vmem:[%s1 + $0x2c] sm:$0xf]
        %v350 = vld [vmem:[%s1 + $0x30] sm:$0xf]
        %v351 = vld [vmem:[%s1 + $0x34] sm:$0xf]
        %v352 = vld [vmem:[%s1 + $0x38] sm:$0xf]
        %v353 = vld [vmem:[%s1 + $0x3c] sm:$0xf]
        %v354 = vld [vmem:[%s2] sm:$0x1]
        %v356 = vperm.slane %v354, 0
        %v362 = vunpack.c.l.b16 %v334
        %v363 = vunpack.c.l.b16 %v335
        %v364 = vunpack.c.l.b16 %v336
        %v365 = vunpack.c.l.b16 %v337
        %v366 = vpack.c.b16 %v363, %v362
        %v367 = vpack.c.b16 %v365, %v364
        %v386 = vunpack.c.l.b16 %v338
        %v387 = vunpack.c.l.b16 %v339
        %v388 = vunpack.c.l.b16 %v340
        %v389 = vunpack.c.l.b16 %v341
        %v390 = vunpack.c.l.b16 %v342
        %v391 = vunpack.c.l.b16 %v343
        %v392 = vunpack.c.l.b16 %v344
        %v393 = vunpack.c.l.b16 %v345
        %v394 = vunpack.c.l.b16 %v346
        %v395 = vunpack.c.l.b16 %v347
        %v396 = vunpack.c.l.b16 %v348
        %v397 = vunpack.c.l.b16 %v349
        %v398 = vunpack.c.l.b16 %v350
        %v399 = vunpack.c.l.b16 %v351
        %v400 = vunpack.c.l.b16 %v352
        %v401 = vunpack.c.l.b16 %v353
        %v402 = vpack.c.b16 %v387, %v386
        %v403 = vpack.c.b16 %v389, %v388
        %v404 = vpack.c.b16 %v391, %v390
        %v405 = vpack.c.b16 %v393, %v392
        %v406 = vpack.c.b16 %v395, %v394
        %v407 = vpack.c.b16 %v397, %v396
        %v408 = vpack.c.b16 %v399, %v398
        %v409 = vpack.c.b16 %v401, %v400
        %418 = vmatpush.bf16.msra.mxu0 %v409
        %419 = vmatpush.bf16.msra.mxu0 %v408
        %420 = vmatpush.bf16.msra.mxu0 %v407
        %421 = vmatpush.bf16.msra.mxu0 %v406
        %422 = vmatpush.bf16.msra.mxu0 %v405
        %423 = vmatpush.bf16.msra.mxu0 %v404
        %424 = vmatpush.bf16.msra.mxu0 %v403
        %425 = vmatpush.bf16.msra.mxu0 %v402
        %426 = vmatmul.bf16.gmra.mxu0 %v366
        %v427 = vpop.f32.mrf.mxu0
        %v428 = vadd.f32 %v356, %v427
        %v429 = vpop.f32.mrf.mxu0
        %v430 = vadd.f32 %v356, %v429
        %431 = vmatmul.bf16.gmra.mxu0 %v367
        %v432 = vpop.f32.mrf.mxu0
        %v433 = vadd.f32 %v356, %v432
        %v434 = vpop.f32.mrf.mxu0
        %v435 = vadd.f32 %v356, %v434
        %436 = vdwg.mxu0
        %v437 = vmax.f32 %v428, 0.0
        %v438 = vmax.f32 %v430, 0.0
        %v439 = vmax.f32 %v433, 0.0
        %v440 = vmax.f32 %v435, 0.0
        %v441 = vpack.c.bf16 %v438, %v437
        %v442 = vpack.c.bf16 %v440, %v439
        %v443 = vld [vmem:[#allocation2] sm:$0xf]
        %v444 = vld [vmem:[#allocation2 + $0x4] sm:$0xf]
        %v445 = vld [vmem:[#allocation2 + $0x8] sm:$0xf]
        %v446 = vld [vmem:[#allocation2 + $0xc] sm:$0xf]
        %v447 = vld [vmem:[#allocation2 + $0x10] sm:$0xf]
        %v448 = vld [vmem:[#allocation2 + $0x14] sm:$0xf]
        %v449 = vld [vmem:[#allocation2 + $0x18] sm:$0xf]
        %v450 = vld [vmem:[#allocation2 + $0x1c] sm:$0xf]
        %v451 = vld [vmem:[#allocation2 + $0x20] sm:$0xf]
        %v452 = vld [vmem:[#allocation2 + $0x24] sm:$0xf]
        %v453 = vld [vmem:[#allocation2 + $0x28] sm:$0xf]
        %v454 = vld [vmem:[#allocation2 + $0x2c] sm:$0xf]
        %v455 = vld [vmem:[#allocation2 + $0x30] sm:$0xf]
        %v456 = vld [vmem:[#allocation2 + $0x34] sm:$0xf]
        %v457 = vld [vmem:[#allocation2 + $0x38] sm:$0xf]
        %v458 = vld [vmem:[#allocation2 + $0x3c] sm:$0xf]
        %v459 = vld [vmem:[%s4] sm:$0x1]
        %v461 = vperm.slane %v459, 0
        %v479 = vunpack.c.l.b16 %v443
        %v480 = vunpack.c.l.b16 %v444
        %v481 = vunpack.c.l.b16 %v445
        %v482 = vunpack.c.l.b16 %v446
        %v483 = vunpack.c.l.b16 %v447
        %v484 = vunpack.c.l.b16 %v448
        %v485 = vunpack.c.l.b16 %v449
        %v486 = vunpack.c.l.b16 %v450
        %v487 = vunpack.c.l.b16 %v451
        %v488 = vunpack.c.l.b16 %v452
        %v489 = vunpack.c.l.b16 %v453
        %v490 = vunpack.c.l.b16 %v454
        %v491 = vunpack.c.l.b16 %v455
        %v492 = vunpack.c.l.b16 %v456
        %v493 = vunpack.c.l.b16 %v457
        %v494 = vunpack.c.l.b16 %v458
        %v495 = vpack.c.b16 %v480, %v479
        %v496 = vpack.c.b16 %v482, %v481
        %v497 = vpack.c.b16 %v484, %v483
        %v498 = vpack.c.b16 %v486, %v485
        %v499 = vpack.c.b16 %v488, %v487
        %v500 = vpack.c.b16 %v490, %v489
        %v501 = vpack.c.b16 %v492, %v491
        %v502 = vpack.c.b16 %v494, %v493
        %511 = vmatpush.bf16.msra.mxu0 %v502
        %512 = vmatpush.bf16.msra.mxu0 %v501
        %513 = vmatpush.bf16.msra.mxu0 %v500
        %514 = vmatpush.bf16.msra.mxu0 %v499
        %515 = vmatpush.bf16.msra.mxu0 %v498
        %516 = vmatpush.bf16.msra.mxu0 %v497
        %517 = vmatpush.bf16.msra.mxu0 %v496
        %518 = vmatpush.bf16.msra.mxu0 %v495
        %519 = vmatmul.bf16.gmra.mxu0 %v441
        %v520 = vpop.f32.mrf.mxu0
        %v521 = vadd.f32 %v461, %v520
        %v522 = vpop.f32.mrf.mxu0
        %v523 = vadd.f32 %v461, %v522
        %524 = vmatmul.bf16.gmra.mxu0 %v442
        %v525 = vpop.f32.mrf.mxu0
        %v526 = vadd.f32 %v461, %v525
        %v527 = vpop.f32.mrf.mxu0
        %v528 = vadd.f32 %v461, %v527
        %529 = vdwg.mxu0
        %v530 = vmax.f32 %v521, 0.0
        %v531 = vmax.f32 %v523, 0.0
        %v532 = vmax.f32 %v526, 0.0
        %v533 = vmax.f32 %v528, 0.0
        %v534 = vpack.c.bf16 %v531, %v530
        %v535 = vpack.c.bf16 %v533, %v532
        %v536 = vld [vmem:[#allocation4] sm:$0xf]
        %v537 = vld [vmem:[#allocation4 + $0x4] sm:$0xf]
        %v538 = vld [vmem:[#allocation4 + $0x8] sm:$0xf]
        %v539 = vld [vmem:[#allocation4 + $0xc] sm:$0xf]
        %v540 = vld [vmem:[#allocation4 + $0x10] sm:$0xf]
        %v541 = vld [vmem:[#allocation4 + $0x14] sm:$0xf]
        %v542 = vld [vmem:[#allocation4 + $0x18] sm:$0xf]
        %v543 = vld [vmem:[#allocation4 + $0x1c] sm:$0xf]
        %v544 = vld [vmem:[#allocation4 + $0x20] sm:$0xf]
        %v545 = vld [vmem:[#allocation4 + $0x24] sm:$0xf]
        %v546 = vld [vmem:[#allocation4 + $0x28] sm:$0xf]
        %v547 = vld [vmem:[#allocation4 + $0x2c] sm:$0xf]
        %v548 = vld [vmem:[#allocation4 + $0x30] sm:$0xf]
        %v549 = vld [vmem:[#allocation4 + $0x34] sm:$0xf]
        %v550 = vld [vmem:[#allocation4 + $0x38] sm:$0xf]
        %v551 = vld [vmem:[#allocation4 + $0x3c] sm:$0xf]
        %v552 = vld [vmem:[%s6] sm:$0x1]
        %v554 = vperm.slane %v552, 0
        %v572 = vunpack.c.l.b16 %v536
        %v573 = vunpack.c.l.b16 %v537
        %v574 = vunpack.c.l.b16 %v538
        %v575 = vunpack.c.l.b16 %v539
        %v576 = vunpack.c.l.b16 %v540
        %v577 = vunpack.c.l.b16 %v541
        %v578 = vunpack.c.l.b16 %v542
        %v579 = vunpack.c.l.b16 %v543
        %v580 = vunpack.c.l.b16 %v544
        %v581 = vunpack.c.l.b16 %v545
        %v582 = vunpack.c.l.b16 %v546
        %v583 = vunpack.c.l.b16 %v547
        %v584 = vunpack.c.l.b16 %v548
        %v585 = vunpack.c.l.b16 %v549
        %v586 = vunpack.c.l.b16 %v550
        %v587 = vunpack.c.l.b16 %v551
        %v588 = vpack.c.b16 %v573, %v572
        %v589 = vpack.c.b16 %v575, %v574
        %v590 = vpack.c.b16 %v577, %v576
        %v591 = vpack.c.b16 %v579, %v578
        %v592 = vpack.c.b16 %v581, %v580
        %v593 = vpack.c.b16 %v583, %v582
        %v594 = vpack.c.b16 %v585, %v584
        %v595 = vpack.c.b16 %v587, %v586
        %604 = vmatpush.bf16.msra.mxu0 %v595
        %605 = vmatpush.bf16.msra.mxu0 %v594
        %606 = vmatpush.bf16.msra.mxu0 %v593
        %607 = vmatpush.bf16.msra.mxu0 %v592
        %608 = vmatpush.bf16.msra.mxu0 %v591
        %609 = vmatpush.bf16.msra.mxu0 %v590
        %610 = vmatpush.bf16.msra.mxu0 %v589
        %611 = vmatpush.bf16.msra.mxu0 %v588
        %612 = vmatmul.bf16.gmra.mxu0 %v534
        %v613 = vpop.f32.mrf.mxu0
        %v614 = vadd.f32 %v554, %v613
        %v615 = vpop.f32.mrf.mxu0
        %v616 = vadd.f32 %v554, %v615
        %617 = vmatmul.bf16.gmra.mxu0 %v535
        %v618 = vpop.f32.mrf.mxu0
        %v619 = vadd.f32 %v554, %v618
        %v620 = vpop.f32.mrf.mxu0
        %v621 = vadd.f32 %v554, %v620
        %622 = vdwg.mxu0
        %623 = vmax.xlane.f32.xlu0 %v614
        %v624 = vpop.xlane.xlu0 %623
        %625 = vmax.xlane.f32.xlu0 %v616
        %v626 = vpop.xlane.xlu0 %625
        %627 = vmax.xlane.f32.xlu0 %v619
        %v628 = vpop.xlane.xlu0 %627
        %629 = vmax.xlane.f32.xlu0 %v621
        %v630 = vpop.xlane.xlu0 %629
        %v631 = vsub.f32 %v614, %v624
        %v632 = vsub.f32 %v616, %v626
        %v633 = vsub.f32 %v619, %v628
        %v634 = vsub.f32 %v621, %v630
        %v635 = vmul.f32 %v631, 1.442695
        %v636 = vpow.pop %v635
        %v637 = vmul.f32 %v632, 1.442695
        %v638 = vpow.pop %v637
        %v639 = vmul.f32 %v633, 1.442695
        %v640 = vpow.pop %v639
        %v641 = vmul.f32 %v634, 1.442695
        %v642 = vpow.pop %v641
        %643 = vadd.xlane.f32.xlu0 %v636
        %v644 = vpop.xlane.xlu0 %643
        %645 = vadd.xlane.f32.xlu0 %v638
        %v646 = vpop.xlane.xlu0 %645
        %647 = vadd.xlane.f32.xlu0 %v640
        %v648 = vpop.xlane.xlu0 %647
        %649 = vadd.xlane.f32.xlu0 %v642
        %v650 = vpop.xlane.xlu0 %649
        %v651 = vrcp.pop %v644
        %v652 = vrcp.pop %v646
        %v653 = vrcp.pop %v648
        %v654 = vrcp.pop %v650
        %v655 = vmul.f32 %v636, %v651
        %v656 = vmul.f32 %v638, %v652
        %v657 = vmul.f32 %v640, %v653
        %v658 = vmul.f32 %v642, %v654
        %659 = vst [vmem:[%s314] sm:$0xff] %v655
        %660 = vst [vmem:[%s314 + $0x8] sm:$0xff] %v656
        %661 = vst [vmem:[%s314 + $0x10] sm:$0xff] %v657
        %662 = vst [vmem:[%s314 + $0x18] sm:$0xff] %v658
        %s663 = sand.u32 %s180, 1
        %s664 = sand.u32 %s180, 1
        %s665 = smul.addr %s664, 32
        %s666 = scalar_lea.vmem [#allocation6], %s665
        // Predicated region
        $region57: #{_ptdeep_forward.1} parent=47 // pred_check
          %p667 = pneg %p190
        $region58: #{_ptdeep_forward.1} parent=47 // pred_check_branch
          %669 = sbr.rel (%p667) target = $region60
        $region59: #{_ptdeep_forward.1} parent=47 // pred_region
          %s670 = smul.u32 4, %s20
          %s671 = ssub.s32 5, %s670
          %p672 = scmp.lt.s32.totalorder %s671, 4
          %s673 = scalar_select %p672, %s671, 4
          %s674 = smul.u32 8, %s673
          %p675 = scmp.ne.s32.totalorder 0, %s674
          %s676 = smul.addr %s670, 8
          %s677 = scalar_lea.vmem %s7, %s676
          // Predicated region
          $region61: #{_ptdeep_forward.1} parent=59 // pred_check
            %p678 = pneg %p675
          $region62: #{_ptdeep_forward.1} parent=59 // pred_check_branch
            %680 = sbr.rel (%p678) target = $region64
          $region63: #{_ptdeep_forward.1} parent=59 // pred_region
            // Predicated region
            $region65: #{_ptdeep_forward.1} parent=63 // pred_check
              _
            $region66: #{_ptdeep_forward.1} parent=63 // pred_check_branch
              %682 = sbr.rel (0) target = $region68
            $region67: #{_ptdeep_forward.1} parent=63 // pred_region
              // Predicated region
              $region87: #{_ptdeep_forward.1} parent=67 // pred_check
                _
              $region88: #{_ptdeep_forward.1} parent=67 // pred_check_branch
                %738 = sbr.rel (0) target = $region90
              $region89: #{_ptdeep_forward.1} parent=67 // pred_region
                %s739 = sshrl.u32 %s673, 2
                // While loop
                $region91: #{_ptdeep_forward.1} parent=89 // loop_pre_header
                  _
                $region92: #{_ptdeep_forward.1} parent=89 // loop_header
                  %s741 = sphi 0, %s743
                  %p742 = scmp.ge.s32.totalorder %s741, %s739
                  %s746 = sphi 0, %s759
                  %s747 = sphi %s666, %s762
                  %s748 = sphi %s677, %s763
                $region93: #{_ptdeep_forward.1} parent=89 // loop_header_branch
                  %745 = sbr.rel (%p742) target = $region97
                $region94: #{_ptdeep_forward.1} parent=89 // loop_body
                  %v749 = vld [vmem:[%s747] sm:$0xff]
                  %750 = vst [vmem:[%s748] sm:$0xff] %v749
                  %v751 = vld [vmem:[%s747 + $0x8] sm:$0xff]
                  %752 = vst [vmem:[%s748 + $0x8] sm:$0xff] %v751
                  %v753 = vld [vmem:[%s747 + $0x10] sm:$0xff]
                  %754 = vst [vmem:[%s748 + $0x10] sm:$0xff] %v753
                  %v755 = vld [vmem:[%s747 + $0x18] sm:$0xff]
                  %756 = vst [vmem:[%s748 + $0x18] sm:$0xff] %v755
                  %s757 = sadd.s32 1, %s746
                  %p758 = scmp.ge.s32.totalorder %s757, %s739
                  %s759 = scalar_select %p758, 0, %s757
                  %s760 = smul.u32 %s759, 32
                  %s761 = smul.u32 %s759, 32
                  %s762 = scalar_lea.vmem %s666, %s760 [#allocation6]
                  %s763 = scalar_lea.vmem %s677, %s761
                $region95: #{_ptdeep_forward.1} parent=89 // loop_footer
                  %s743 = sadd.s32 %s741, 1
                $region96: #{_ptdeep_forward.1} parent=89 // loop_footer_branch
                  %740 = sbr.rel target = $region92
                $region97: #{_ptdeep_forward.1} parent=89 // loop_exit
                  _
                %s764 = sshrl.u32 %s673, 2
                %s765 = sand.u32 %s673, 3
                %s766 = smul.u32 %s764, 4
                %s767 = smul.u32 8, %s766
                %s768 = scalar_lea.vmem %s666, %s767 [#allocation6]
                %s769 = smul.u32 8, %s766
                %s770 = scalar_lea.vmem %s677, %s769
                // While loop
                $region98: #{_ptdeep_forward.1} parent=89 // loop_pre_header
                  _
                $region99: #{_ptdeep_forward.1} parent=89 // loop_header
                  %s772 = sphi 0, %s774
                  %p773 = scmp.ge.s32.totalorder %s772, %s765
                  %s777 = sphi 0, %s784
                  %s778 = sphi %s768, %s787
                  %s779 = sphi %s770, %s788
                $region100: #{_ptdeep_forward.1} parent=89 // loop_header_branch
                  %776 = sbr.rel (%p773) target = $region104
                $region101: #{_ptdeep_forward.1} parent=89 // loop_body
                  %v780 = vld [vmem:[%s778] sm:$0xff]
                  %781 = vst [vmem:[%s779] sm:$0xff] %v780
                  %s782 = sadd.s32 1, %s777
                  %p783 = scmp.ge.s32.totalorder %s782, %s765
                  %s784 = scalar_select %p783, 0, %s782
                  %s785 = smul.u32 %s784, 8
                  %s786 = smul.u32 %s784, 8
                  %s787 = scalar_lea.vmem %s768, %s785 [#allocation6]
                  %s788 = scalar_lea.vmem %s770, %s786
                $region102: #{_ptdeep_forward.1} parent=89 // loop_footer
                  %s774 = sadd.s32 %s772, 1
                $region103: #{_ptdeep_forward.1} parent=89 // loop_footer_branch
                  %771 = sbr.rel target = $region99
                $region104: #{_ptdeep_forward.1} parent=89 // loop_exit
                  _
              $region90: #{_ptdeep_forward.1} parent=67 // pred_fallthru
                _
              // Predicated region
              $region105: #{_ptdeep_forward.1} parent=67 // pred_check
                _
              $region106: #{_ptdeep_forward.1} parent=67 // pred_check_branch
                %790 = sbr.rel target = $region108
              $region107: #{_ptdeep_forward.1} parent=67 // pred_region
                _
              $region108: #{_ptdeep_forward.1} parent=67 // pred_fallthru
                _
            $region68: #{_ptdeep_forward.1} parent=63 // pred_fallthru
              _
            // Predicated region
            $region69: #{_ptdeep_forward.1} parent=63 // pred_check
              _
            $region70: #{_ptdeep_forward.1} parent=63 // pred_check_branch
              %684 = sbr.rel target = $region72
            $region71: #{_ptdeep_forward.1} parent=63 // pred_region
              %s686 = ssub.s32 256, 1
              %s687 = sshrl.u32 %s673, 2
              // While loop
              $region73: #{_ptdeep_forward.1} parent=71 // loop_pre_header
                _
              $region74: #{_ptdeep_forward.1} parent=71 // loop_header
                %s689 = sphi 0, %s691
                %p690 = scmp.ge.s32.totalorder %s689, %s687
                %s694 = sphi 0, %s707
                %s695 = sphi %s666, %s710
                %s696 = sphi %s677, %s711
              $region75: #{_ptdeep_forward.1} parent=71 // loop_header_branch
                %693 = sbr.rel (%p690) target = $region79
              $region76: #{_ptdeep_forward.1} parent=71 // loop_body
                %v697 = vld [vmem:[%s695] sm:%s686]
                %698 = vst [vmem:[%s696] sm:%s686] %v697
                %v699 = vld [vmem:[%s695 + $0x8] sm:%s686]
                %700 = vst [vmem:[%s696 + $0x8] sm:%s686] %v699
                %v701 = vld [vmem:[%s695 + $0x10] sm:%s686]
                %702 = vst [vmem:[%s696 + $0x10] sm:%s686] %v701
                %v703 = vld [vmem:[%s695 + $0x18] sm:%s686]
                %704 = vst [vmem:[%s696 + $0x18] sm:%s686] %v703
                %s705 = sadd.s32 1, %s694
                %p706 = scmp.ge.s32.totalorder %s705, %s687
                %s707 = scalar_select %p706, 0, %s705
                %s708 = smul.u32 %s707, 32
                %s709 = smul.u32 %s707, 32
                %s710 = scalar_lea.vmem %s666, %s708 [#allocation6]
                %s711 = scalar_lea.vmem %s677, %s709
              $region77: #{_ptdeep_forward.1} parent=71 // loop_footer
                %s691 = sadd.s32 %s689, 1
              $region78: #{_ptdeep_forward.1} parent=71 // loop_footer_branch
                %688 = sbr.rel target = $region74
              $region79: #{_ptdeep_forward.1} parent=71 // loop_exit
                _
              %s712 = sshrl.u32 %s673, 2
              %s713 = sand.u32 %s673, 3
              %s714 = smul.u32 %s712, 4
              %s715 = smul.u32 8, %s714
              %s716 = scalar_lea.vmem %s666, %s715 [#allocation6]
              %s717 = smul.u32 8, %s714
              %s718 = scalar_lea.vmem %s677, %s717
              // While loop
              $region80: #{_ptdeep_forward.1} parent=71 // loop_pre_header
                _
              $region81: #{_ptdeep_forward.1} parent=71 // loop_header
                %s720 = sphi 0, %s722
                %p721 = scmp.ge.s32.totalorder %s720, %s713
                %s725 = sphi 0, %s732
                %s726 = sphi %s716, %s735
                %s727 = sphi %s718, %s736
              $region82: #{_ptdeep_forward.1} parent=71 // loop_header_branch
                %724 = sbr.rel (%p721) target = $region86
              $region83: #{_ptdeep_forward.1} parent=71 // loop_body
                %v728 = vld [vmem:[%s726] sm:%s686]
                %729 = vst [vmem:[%s727] sm:%s686] %v728
                %s730 = sadd.s32 1, %s725
                %p731 = scmp.ge.s32.totalorder %s730, %s713
                %s732 = scalar_select %p731, 0, %s730
                %s733 = smul.u32 %s732, 8
                %s734 = smul.u32 %s732, 8
                %s735 = scalar_lea.vmem %s716, %s733 [#allocation6]
                %s736 = scalar_lea.vmem %s718, %s734
              $region84: #{_ptdeep_forward.1} parent=71 // loop_footer
                %s722 = sadd.s32 %s720, 1
              $region85: #{_ptdeep_forward.1} parent=71 // loop_footer_branch
                %719 = sbr.rel target = $region81
              $region86: #{_ptdeep_forward.1} parent=71 // loop_exit
                _
            $region72: #{_ptdeep_forward.1} parent=63 // pred_fallthru
              _
          $region64: #{_ptdeep_forward.1} parent=59 // pred_fallthru
            _
          %791 = vnop
        $region60: #{_ptdeep_forward.1} parent=47 // pred_fallthru
          _
      $region48: #{_ptdeep_forward.1} parent=5 // pred_fallthru
        _
      %p792 = scmp.le.s32.totalorder 2, %s15
      // Predicated region
      $region109: #{_ptdeep_forward.1} parent=5 // pred_check
        %p793 = pneg %p792
      $region110: #{_ptdeep_forward.1} parent=5 // pred_check_branch
        %795 = sbr.rel (%p793) target = $region112
      $region111: #{_ptdeep_forward.1} parent=5 // pred_region
        %s796 = ssub.s32 %s15, 2
        // Predicated region
        $region113: #{_ptdeep_forward.1} parent=111 // pred_check
          %p797 = pneg %p196
        $region114: #{_ptdeep_forward.1} parent=111 // pred_check_branch
          %799 = sbr.rel (%p797) target = $region116
        $region115: #{_ptdeep_forward.1} parent=111 // pred_region
          %s800 = sand.u32 %s181, 1
          %s801 = sand.u32 %s181, 1
          %s802 = smul.addr %s801, 32
          %s803 = scalar_lea.vmem [#allocation6], %s802
        $region116: #{_ptdeep_forward.1} parent=111 // pred_fallthru
          _
      $region112: #{_ptdeep_forward.1} parent=5 // pred_fallthru
        _
    $region6: #{_ptdeep_forward.1} parent=1 // loop_footer
      %s19 = sadd.s32 1, %s15
    $region7: #{_ptdeep_forward.1} parent=1 // loop_footer_branch
      %14 = sbr.rel target = $region3
    $region8: #{_ptdeep_forward.1} parent=1 // loop_exit
      _
    %804 = vsyncpa [#allocation3], 1
    %s805 = scalar_lea.sflag [#allocation3], 1
    %806 = vsyncpa %s805, 1
    %807 = vsyncpa [#allocation5], 1

</llo_original>
